<compile_context>
chip_gen: v7x
topology: tpu7x:2x2x1
jax: 0.10.0
libtpu: 0.0.40
codegen_flags: <defaults>
</compile_context>

<pallas_src>
import jax
import jax.numpy as jnp
from jax import lax
from jax.experimental import pallas as pl
from jax.experimental.pallas import tpu as pltpu

_LN_EPS = 1e-5  # nn.LayerNorm default


# ----------------------------------------------------------------------------
# VMEM budgeting
# ----------------------------------------------------------------------------
def _vmem_capacity_bytes():
    """Per-core VMEM capacity; conservative fallback (v7x per-TC) off-TPU."""
    try:
        return int(pltpu.get_tpu_info().vmem_capacity_bytes)
    except Exception:
        return 64 << 20


def _choose_tm(M, D, itemsize, apply_dropout):
    """Row-tile size: biggest 8-multiple whose double-buffered I/O tiles plus
    f32 compute temps fit a generation-aware VMEM budget, capped at 2048 rows.
    Also keeps the grid >= 2 steps when possible so the 'parallel' axis can
    shard across both TensorCores on v7x."""
    if M <= 8:
        return M
    cap = _vmem_capacity_bytes()
    budget = min(cap // 2, 48 << 20)          # 32 MiB on v7x, 48 MiB on v5e/v6e
    # residual + layer_output (+ mask) + output tiles, double-buffered.
    io_per_row = D * 2 * (2 * itemsize + itemsize + (4 if apply_dropout else 0))
    tmp_per_row = D * 24                      # f32 temporaries (y, y*y, out)
    per_row = max(io_per_row + tmp_per_row, 1)
    tm = int(max(8, min(2048, budget // per_row)))
    tm -= tm % 8
    if tm >= M:
        if M >= 16:
            half = M // 2
            tm = max(8, half - (half % 8))    # grid >= 2 (v7x megacore)
        else:
            tm = M                            # tiny problem: full extent
    return tm


# ----------------------------------------------------------------------------
# Kernels
# ----------------------------------------------------------------------------
def _layernorm_write(y, gamma_ref, beta_ref, o_ref):
    """Single-pass LayerNorm over the last axis of `y`, f32 statistics."""
    yf = y.astype(jnp.float32)
    inv_d = jnp.float32(1.0 / yf.shape[-1])
    mean = jnp.sum(yf, axis=-1, keepdims=True) * inv_d
    mean_sq = jnp.sum(yf * yf, axis=-1, keepdims=True) * inv_d
    var = jnp.maximum(mean_sq - mean * mean, jnp.float32(0.0))
    inv_std = lax.rsqrt(var + jnp.float32(_LN_EPS))
    gamma = gamma_ref[...].astype(jnp.float32)
    beta = beta_ref[...].astype(jnp.float32)
    o_ref[...] = ((yf - mean) * inv_std * gamma + beta).astype(o_ref.dtype)


def _eval_kernel(res_ref, x_ref, gamma_ref, beta_ref, o_ref):
    # Inference: dropout is identity.
    _layernorm_write(res_ref[...] + x_ref[...], gamma_ref, beta_ref, o_ref)


def _make_train_kernel(keep_prob):
    keep_prob = float(keep_prob)
    inv_keep = 1.0 / keep_prob if keep_prob > 0.0 else 0.0

    def kernel(res_ref, x_ref, u_ref, gamma_ref, beta_ref, o_ref):
        x = x_ref[...]
        # Threshold dropout: keep iff u < keep_prob, scale kept values by 1/keep.
        keep = u_ref[...] < jnp.float32(keep_prob)
        x = jnp.where(keep,
                      x * jnp.asarray(inv_keep, dtype=x.dtype),
                      jnp.asarray(0.0, dtype=x.dtype))
        _layernorm_write(res_ref[...] + x, gamma_ref, beta_ref, o_ref)

    return kernel


# ----------------------------------------------------------------------------
# Wrapper
# ----------------------------------------------------------------------------
def residual_block_forward(residual, layer_output, gamma, beta, *,
                           dropout_rate=0.0, training=False, dropout_rng=None,
                           tm=None):
    """y = LayerNorm(residual + Dropout(layer_output)), matching ResidualBlock.

    residual, layer_output: [..., d_output]
    gamma, beta:            [d_output]   (nn.LayerNorm weight / bias)
    """
    assert residual.shape == layer_output.shape
    *lead, d = residual.shape
    M = 1
    for s in lead:
        M *= s

    res2 = residual.reshape(M, d)
    x2 = layer_output.reshape(M, d)
    g2 = gamma.reshape(1, d)
    b2 = beta.reshape(1, d)

    apply_dropout = bool(training) and float(dropout_rate) > 0.0
    keep_prob = 1.0 - float(dropout_rate)

    if tm is None:
        tm = _choose_tm(M, d, residual.dtype.itemsize, apply_dropout)
    grid = (pl.cdiv(M, tm),)

    # Explicit VMEM limit: double-buffered I/O tiles + f32 temps + headroom for
    # Mosaic internal scratch (don't rely on the scoped default, esp. on v5e).
    n_io = 4 if apply_dropout else 3
    per_step = tm * d * (2 * n_io * residual.dtype.itemsize + 24)
    vmem_limit = int(min(_vmem_capacity_bytes(),
                         max(32 << 20, per_step + (8 << 20))))

    row_spec = pl.BlockSpec((tm, d), lambda i: (i, 0))
    vec_spec = pl.BlockSpec((1, d), lambda i: (0, 0))
    compiler_params = pltpu.CompilerParams(
        dimension_semantics=("parallel",),
        vmem_limit_bytes=vmem_limit,
    )

    if apply_dropout:
        # TODO(synk): in-kernel pltpu.prng_random_bits would avoid this extra
        # HBM stream, but it has no interpret/CPU lowering; the mask is a
        # jax.random uniform stream instead (same dropout semantics, not
        # bit-identical to torch's RNG).
        if dropout_rng is None:
            dropout_rng = jax.random.PRNGKey(0)
        u = jax.random.uniform(dropout_rng, (M, d), dtype=jnp.float32)
        kernel = _make_train_kernel(keep_prob)
        in_specs = [row_spec, row_spec, row_spec, vec_spec, vec_spec]
        args = (res2, x2, u, g2, b2)
    else:
        kernel = _eval_kernel
        in_specs = [row_spec, row_spec, vec_spec, vec_spec]
        args = (res2, x2, g2, b2)

    out = pl.pallas_call(
        kernel,
        out_shape=jax.ShapeDtypeStruct((M, d), residual.dtype),
        grid=grid,
        in_specs=in_specs,
        out_specs=row_spec,
        compiler_params=compiler_params,
    )(*args)

    return out.reshape(*lead, d)


# ----------------------------------------------------------------------------
# Demo / self-check
# ----------------------------------------------------------------------------
if __name__ == "__main__":
    batch, seq, d_output = 2, 8, 32
    dropout_rate = 0.1

    key = jax.random.PRNGKey(0)
    kr, kl, kg, kb, kd = jax.random.split(key, 5)
    residual = jax.random.normal(kr, (batch, seq, d_output), dtype=jnp.float32)
    layer_output = jax.random.normal(kl, (batch, seq, d_output), dtype=jnp.float32)
    # nn.LayerNorm initializes weight=1, bias=0; perturb to exercise the affine.
    gamma = jnp.ones((d_output,), jnp.float32) \
        + 0.1 * jax.random.normal(kg, (d_output,), dtype=jnp.float32)
    beta = 0.1 * jax.random.normal(kb, (d_output,), dtype=jnp.float32)

    def ln_ref(y):
        mean = jnp.mean(y, axis=-1, keepdims=True)
        var = jnp.mean((y - mean) ** 2, axis=-1, keepdims=True)
        return (y - mean) / jnp.sqrt(var + _LN_EPS) * gamma + beta

    # Eval mode (dropout = identity): check against pure-JAX reference.
    y_eval = residual_block_forward(residual, layer_output, gamma, beta,
                                    dropout_rate=dropout_rate, training=False)
    jax.block_until_ready(y_eval)
    assert y_eval.shape == (batch, seq, d_output), y_eval.shape
    assert jnp.allclose(y_eval, ln_ref(residual + layer_output),
                        atol=2e-5, rtol=2e-5)

    # Training mode: same uniform stream the kernel consumes -> exact reference.
    y_train = residual_block_forward(residual, layer_output, gamma, beta,
                                     dropout_rate=dropout_rate, training=True,
                                     dropout_rng=kd)
    jax.block_until_ready(y_train)
    keep_prob = 1.0 - dropout_rate
    u = jax.random.uniform(kd, (batch * seq, d_output), dtype=jnp.float32)
    u = u.reshape(batch, seq, d_output)
    dropped = jnp.where(u < jnp.float32(keep_prob),
                        layer_output * jnp.float32(1.0 / keep_prob), 0.0)
    assert y_train.shape == (batch, seq, d_output), y_train.shape
    assert jnp.allclose(y_train, ln_ref(residual + dropped),
                        atol=2e-5, rtol=2e-5)

    print("KERNEL_OK")
</pallas_src>

<mosaic_0001>
module attributes {stable_mosaic.version = 11 : i64} {
  func.func @_eval_kernel(%arg0: i32, %arg1: memref<8x32xf32, #tpu.memory_space<vmem>>, %arg2: memref<8x32xf32, #tpu.memory_space<vmem>>, %arg3: memref<1x32xf32, #tpu.memory_space<vmem>>, %arg4: memref<1x32xf32, #tpu.memory_space<vmem>>, %arg5: memref<8x32xf32, #tpu.memory_space<vmem>>) attributes {dimension_semantics = [#tpu.dimension_semantics<parallel>], iteration_bounds = array<i64: 2>, scalar_prefetch = 0 : i64, scratch_operands = 0 : i64, tpu.core_type = #tpu.core_type<tc>, window_params = [{transform_indices = @transform_0, window_bounds = array<i64: 8, 32>}, {transform_indices = @transform_1, window_bounds = array<i64: 8, 32>}, {pipeline_mode = #tpu.pipeline_mode<synchronous>, transform_indices = @transform_2, window_bounds = array<i64: 1, 32>}, {pipeline_mode = #tpu.pipeline_mode<synchronous>, transform_indices = @transform_3, window_bounds = array<i64: 1, 32>}, {transform_indices = @transform_4, window_bounds = array<i64: 8, 32>}]} {
    %c0 = arith.constant 0 : index
    %c0_0 = arith.constant 0 : index
    %0 = vector.load %arg1[%c0, %c0_0] : memref<8x32xf32, #tpu.memory_space<vmem>>, vector<8x32xf32>
    %c0_1 = arith.constant 0 : index
    %c0_2 = arith.constant 0 : index
    %1 = vector.load %arg2[%c0_1, %c0_2] : memref<8x32xf32, #tpu.memory_space<vmem>>, vector<8x32xf32>
    %2 = arith.addf %0, %1 : vector<8x32xf32>
    %cst = arith.constant dense<0.000000e+00> : vector<8xf32>
    %3 = vector.multi_reduction <add>, %2, %cst [1] : vector<8x32xf32> to vector<8xf32>
    %4 = vector.shape_cast %3 : vector<8xf32> to vector<8x1xf32>
    %cst_3 = arith.constant 3.125000e-02 : f32
    %5 = vector.broadcast %cst_3 : f32 to vector<8x1xf32>
    %6 = arith.mulf %4, %5 : vector<8x1xf32>
    %7 = arith.mulf %2, %2 : vector<8x32xf32>
    %cst_4 = arith.constant dense<0.000000e+00> : vector<8xf32>
    %8 = vector.multi_reduction <add>, %7, %cst_4 [1] : vector<8x32xf32> to vector<8xf32>
    %9 = vector.shape_cast %8 : vector<8xf32> to vector<8x1xf32>
    %cst_5 = arith.constant 3.125000e-02 : f32
    %10 = vector.broadcast %cst_5 : f32 to vector<8x1xf32>
    %11 = arith.mulf %9, %10 : vector<8x1xf32>
    %12 = arith.mulf %6, %6 : vector<8x1xf32>
    %13 = arith.subf %11, %12 : vector<8x1xf32>
    %cst_6 = arith.constant 0.000000e+00 : f32
    %14 = vector.broadcast %cst_6 : f32 to vector<8x1xf32>
    %15 = arith.maximumf %13, %14 : vector<8x1xf32>
    %cst_7 = arith.constant 9.99999974E-6 : f32
    %16 = vector.broadcast %cst_7 : f32 to vector<8x1xf32>
    %17 = arith.addf %15, %16 : vector<8x1xf32>
    %18 = math.rsqrt %17 : vector<8x1xf32>
    %c0_8 = arith.constant 0 : index
    %c0_9 = arith.constant 0 : index
    %19 = vector.load %arg3[%c0_8, %c0_9] : memref<1x32xf32, #tpu.memory_space<vmem>>, vector<1x32xf32>
    %c0_10 = arith.constant 0 : index
    %c0_11 = arith.constant 0 : index
    %20 = vector.load %arg4[%c0_10, %c0_11] : memref<1x32xf32, #tpu.memory_space<vmem>>, vector<1x32xf32>
    %21 = vector.broadcast %6 : vector<8x1xf32> to vector<8x32xf32>
    %22 = arith.subf %2, %21 : vector<8x32xf32>
    %23 = vector.broadcast %18 : vector<8x1xf32> to vector<8x32xf32>
    %24 = arith.mulf %22, %23 : vector<8x32xf32>
    %25 = vector.broadcast %19 : vector<1x32xf32> to vector<8x32xf32>
    %26 = arith.mulf %24, %25 : vector<8x32xf32>
    %27 = vector.broadcast %20 : vector<1x32xf32> to vector<8x32xf32>
    %28 = arith.addf %26, %27 : vector<8x32xf32>
    %c0_12 = arith.constant 0 : index
    %c0_13 = arith.constant 0 : index
    %29 = vector.load %arg5[%c0_12, %c0_13] : memref<8x32xf32, #tpu.memory_space<vmem>>, vector<8x32xf32>
    tpu.vector_store %arg5[%c0_12, %c0_13], %28 {strides = array<i32>} : memref<8x32xf32, #tpu.memory_space<vmem>>, vector<8x32xf32>,
    return
  }
  func.func @transform_0(%arg0: i32) -> (i32, i32) {
    %c0_i32 = arith.constant 0 : i32
    %c0_i32_0 = arith.constant 0 : i32
    return %arg0, %c0_i32 : i32, i32
  }
  func.func @transform_1(%arg0: i32) -> (i32, i32) {
    %c0_i32 = arith.constant 0 : i32
    %c0_i32_0 = arith.constant 0 : i32
    return %arg0, %c0_i32 : i32, i32
  }
  func.func @transform_2(%arg0: i32) -> (i32, i32) {
    %c0_i32 = arith.constant 0 : i32
    %c0_i32_0 = arith.constant 0 : i32
    %c0_i32_1 = arith.constant 0 : i32
    return %c0_i32, %c0_i32_0 : i32, i32
  }
  func.func @transform_3(%arg0: i32) -> (i32, i32) {
    %c0_i32 = arith.constant 0 : i32
    %c0_i32_0 = arith.constant 0 : i32
    %c0_i32_1 = arith.constant 0 : i32
    return %c0_i32, %c0_i32_0 : i32, i32
  }
  func.func @transform_4(%arg0: i32) -> (i32, i32) {
    %c0_i32 = arith.constant 0 : i32
    %c0_i32_0 = arith.constant 0 : i32
    return %arg0, %c0_i32 : i32, i32
  }
}

</mosaic_0001>

<llo_original>
// kernel: tpu_custom_call.1
$region0: #{tpu_custom_call.1}
  #allocation0 [shape = 'u32[]', space=smem, size = 0x4, offset = 0x4, fixed_abs, tag = 'smem constant byte address 0x4 - core index']
  #allocation1 [shape = 'u32[144,128]{1,0:T(1,128)}', space=vmem, size = 0x12000, scoped, tag = 'internal scratch']
  %s0 = inlined_call_operand.hbm [shape: f32[16,32], index: 0, kind: input, shape index: {}]
  %s1 = inlined_call_operand.hbm [shape: f32[16,32], index: 1, kind: input, shape index: {}]
  %s2 = inlined_call_operand.vmem [shape: f32[1,32], index: 2, kind: input, shape index: {}]
  %s3 = inlined_call_operand.vmem [shape: f32[1,32], index: 3, kind: input, shape index: {}]
  %s4 = inlined_call_operand.hbm [shape: f32[16,32], index: 4, kind: output, shape index: {}]
  %s5 = sld [smem:[#allocation0]]
  $region57: #{tpu_custom_call.1} parent=0
    _
  %s7 = ssub.s32 1, %s5
  %s8 = scalar_select 0, %s7, %s5
  $region1: #{tpu_custom_call.1} parent=0
    #allocation2 [shape = 'u8[8192]{0}', space=vmem, size = 0x2000, scoped, tag = 'input window, operand 0']
    #allocation3 [shape = 's32[2]{0}', space=sflag, size = 0x8, scoped, tag = 'scoped memory for tpu_custom_call.1']
    #allocation4 [shape = 's32[2]{0}', space=sflag, size = 0x8, scoped, tag = 'scoped memory for tpu_custom_call.1']
    #allocation5 [shape = 'u8[8192]{0}', space=vmem, size = 0x2000, scoped, tag = 'input window, operand 1']
    #allocation6 [shape = 's32[2]{0}', space=sflag, size = 0x8, scoped, tag = 'scoped memory for tpu_custom_call.1']
    #allocation7 [shape = 'u8[8192]{0}', space=vmem, size = 0x2000, scoped, tag = 'output window, operand 0']
    %9 = vsyncpa [#allocation3], 0
    %s10 = scalar_lea.sflag [#allocation3], 1
    %11 = vsyncpa %s10, 0
    %12 = vsyncpa [#allocation6], 0
    %s13 = scalar_lea.sflag [#allocation6], 1
    %14 = vsyncpa %s13, 0
    %15 = vsyncpa [#allocation4], 0
    %s16 = scalar_lea.sflag [#allocation4], 1
    %17 = vsyncpa %s16, 0
    loop: start=0, step=1, limit=4
    $region2: #{tpu_custom_call.1} parent=1 // loop_pre_header
      _
    $region3: #{tpu_custom_call.1} parent=1 // loop_header
      %s19 = sphi 0, %s23
      %p20 = scmp.ge.s32.totalorder %s19, 4
      %s29 = sphi 0, %s31
      %s32 = sphi 0, %s29
      %s33 = sphi 0, %s32
      %s49 = sphi 0, %s33
      %s55 = sphi 0, %s57
      %s58 = sphi 0, %s55
      %s59 = sphi 0, %s58
      %s75 = sphi 0, %s59
      %s79 = sphi 0, %s79
      %s81 = sphi 0, %s79
      %s82 = sphi 0, %s81
      %s96 = sphi 0, %s82
      %s100 = sphi 0, %s100
      %s102 = sphi 0, %s100
      %s103 = sphi 0, %s102
      %s117 = sphi 0, %s103
      %s123 = sphi 0, %s125
      %s126 = sphi 0, %s123
      %s127 = sphi 0, %s126
      %s143 = sphi 0, %s127
    $region4: #{tpu_custom_call.1} parent=1 // loop_header_branch
      %22 = sbr.rel (%p20) target = $region8
    $region5: #{tpu_custom_call.1} parent=1 // loop_body
      %s24 = ssub.s32 %s19, 1
      %s25 = ssub.s32 %s19, 2
      %s26 = sadd.s32 %s19, 1
      %s27 = ssub.s32 %s19, %s26
      %p28 = scmp.eq.s32.totalorder %s27, 0
      %s30 = sadd.s32 %s29, 1
      %s31 = scalar_select %p28, %s29, %s30
      %p34 = pneg %p28
      %p35 = scmp.eq.s32.totalorder %s19, 1
      %p36 = por %p34, %p35
      %p37 = scmp.ne.s32.totalorder %s29, %s32
      %p38 = scmp.eq.s32.totalorder %s19, 0
      %p39 = por %p37, %p38
      %p40 = scmp.ne.s32.totalorder %s29, %s32
      %p41 = scmp.eq.s32.totalorder %s24, 1
      %p42 = por %p40, %p41
      %p43 = scmp.ne.s32.totalorder %s32, %s33
      %p44 = scmp.eq.s32.totalorder %s24, 0
      %p45 = por %p43, %p44
      %p46 = scmp.ne.s32.totalorder %s32, %s33
      %p47 = scmp.eq.s32.totalorder %s25, 1
      %p48 = por %p46, %p47
      %p50 = scmp.ne.s32.totalorder %s33, %s49
      %p51 = scmp.eq.s32.totalorder %s25, 0
      %p52 = por %p50, %p51
      %s53 = ssub.s32 %s19, %s26
      %p54 = scmp.eq.s32.totalorder %s53, 0
      %s56 = sadd.s32 %s55, 1
      %s57 = scalar_select %p54, %s55, %s56
      %p60 = pneg %p54
      %p61 = scmp.eq.s32.totalorder %s19, 1
      %p62 = por %p60, %p61
      %p63 = scmp.ne.s32.totalorder %s55, %s58
      %p64 = scmp.eq.s32.totalorder %s19, 0
      %p65 = por %p63, %p64
      %p66 = scmp.ne.s32.totalorder %s55, %s58
      %p67 = scmp.eq.s32.totalorder %s24, 1
      %p68 = por %p66, %p67
      %p69 = scmp.ne.s32.totalorder %s58, %s59
      %p70 = scmp.eq.s32.totalorder %s24, 0
      %p71 = por %p69, %p70
      %p72 = scmp.ne.s32.totalorder %s58, %s59
      %p73 = scmp.eq.s32.totalorder %s25, 1
      %p74 = por %p72, %p73
      %p76 = scmp.ne.s32.totalorder %s59, %s75
      %p77 = scmp.eq.s32.totalorder %s25, 0
      %p78 = por %p76, %p77
      %s80 = sadd.s32 %s79, 1
      %p83 = scmp.eq.s32.totalorder %s19, 1
      %p84 = scmp.ne.s32.totalorder %s79, %s81
      %p85 = scmp.eq.s32.totalorder %s19, 0
      %p86 = por %p84, %p85
      %p87 = scmp.ne.s32.totalorder %s79, %s81
      %p88 = scmp.eq.s32.totalorder %s24, 1
      %p89 = por %p87, %p88
      %p90 = scmp.ne.s32.totalorder %s81, %s82
      %p91 = scmp.eq.s32.totalorder %s24, 0
      %p92 = por %p90, %p91
      %p93 = scmp.ne.s32.totalorder %s81, %s82
      %p94 = scmp.eq.s32.totalorder %s25, 1
      %p95 = por %p93, %p94
      %p97 = scmp.ne.s32.totalorder %s82, %s96
      %p98 = scmp.eq.s32.totalorder %s25, 0
      %p99 = por %p97, %p98
      %s101 = sadd.s32 %s100, 1
      %p104 = scmp.eq.s32.totalorder %s19, 1
      %p105 = scmp.ne.s32.totalorder %s100, %s102
      %p106 = scmp.eq.s32.totalorder %s19, 0
      %p107 = por %p105, %p106
      %p108 = scmp.ne.s32.totalorder %s100, %s102
      %p109 = scmp.eq.s32.totalorder %s24, 1
      %p110 = por %p108, %p109
      %p111 = scmp.ne.s32.totalorder %s102, %s103
      %p112 = scmp.eq.s32.totalorder %s24, 0
      %p113 = por %p111, %p112
      %p114 = scmp.ne.s32.totalorder %s102, %s103
      %p115 = scmp.eq.s32.totalorder %s25, 1
      %p116 = por %p114, %p115
      %p118 = scmp.ne.s32.totalorder %s103, %s117
      %p119 = scmp.eq.s32.totalorder %s25, 0
      %p120 = por %p118, %p119
      %s121 = ssub.s32 %s19, %s26
      %p122 = scmp.eq.s32.totalorder %s121, 0
      %s124 = sadd.s32 %s123, 1
      %s125 = scalar_select %p122, %s123, %s124
      %p128 = pneg %p122
      %p129 = scmp.eq.s32.totalorder %s19, 1
      %p130 = por %p128, %p129
      %p131 = scmp.ne.s32.totalorder %s123, %s126
      %p132 = scmp.eq.s32.totalorder %s19, 0
      %p133 = por %p131, %p132
      %p134 = scmp.ne.s32.totalorder %s123, %s126
      %p135 = scmp.eq.s32.totalorder %s24, 1
      %p136 = por %p134, %p135
      %p137 = scmp.ne.s32.totalorder %s126, %s127
      %p138 = scmp.eq.s32.totalorder %s24, 0
      %p139 = por %p137, %p138
      %p140 = scmp.ne.s32.totalorder %s126, %s127
      %p141 = scmp.eq.s32.totalorder %s25, 1
      %p142 = por %p140, %p141
      %p144 = scmp.ne.s32.totalorder %s127, %s143
      %p145 = scmp.eq.s32.totalorder %s25, 0
      %p146 = por %p144, %p145
      %p147 = scmp.le.s32.totalorder 1, %s19
      %p148 = scmp.lt.s32.totalorder %s19, 3
      %p149 = pnand %p147, %p148
      %p150 = pneg %p149
      // Predicated region
      $region9: #{tpu_custom_call.1} parent=5 // pred_check
        _
      $region10: #{tpu_custom_call.1} parent=5 // pred_check_branch
        %152 = sbr.rel (%p149) target = $region12
      $region11: #{tpu_custom_call.1} parent=5 // pred_region
        %s153 = ssub.s32 %s19, 1
        // Predicated region
        $region13: #{tpu_custom_call.1} parent=11 // pred_check
          %p154 = pneg %p92
        $region14: #{tpu_custom_call.1} parent=11 // pred_check_branch
          %156 = sbr.rel (%p154) target = $region16
        $region15: #{tpu_custom_call.1} parent=11 // pred_region
          _
        $region16: #{tpu_custom_call.1} parent=11 // pred_fallthru
          _
        // Predicated region
        $region17: #{tpu_custom_call.1} parent=11 // pred_check
          %p157 = pneg %p113
        $region18: #{tpu_custom_call.1} parent=11 // pred_check_branch
          %159 = sbr.rel (%p157) target = $region20
        $region19: #{tpu_custom_call.1} parent=11 // pred_region
          _
        $region20: #{tpu_custom_call.1} parent=11 // pred_fallthru
          _
      $region12: #{tpu_custom_call.1} parent=5 // pred_fallthru
        _
      %p160 = scmp.lt.s32.totalorder %s19, 2
      // Predicated region
      $region21: #{tpu_custom_call.1} parent=5 // pred_check
        %p161 = pneg %p160
      $region22: #{tpu_custom_call.1} parent=5 // pred_check_branch
        %163 = sbr.rel (%p161) target = $region24
      $region23: #{tpu_custom_call.1} parent=5 // pred_region
        // Predicated region
        $region25: #{tpu_custom_call.1} parent=23 // pred_check
          %p164 = pneg %p39
        $region26: #{tpu_custom_call.1} parent=23 // pred_check_branch
          %166 = sbr.rel (%p164) target = $region28
        $region27: #{tpu_custom_call.1} parent=23 // pred_region
          %s167 = sand.u32 %s29, 1
          %s168 = scalar_lea.sflag [#allocation3], %s167
          %s169 = sand.u32 %s29, 1
          %s170 = smul.addr %s169, 8
          %s171 = scalar_lea.vmem [#allocation2], %s170
          %s173 = ssub.s32 128, 128
          %174 = vsyncadd %s168, %s173
          %s175 = smul.addr %s19, 128
          %s176 = scalar_lea.hbm %s0, %s175
          %s178 = sshll.u32 %s171, 4
          %s179 = int_to_ptr.vmem [resolvable:$true] %s178
          %181 = dma.hbm_to_vmem [thread:$0]  %s176, 128, %s179, %s168
        $region28: #{tpu_custom_call.1} parent=23 // pred_fallthru
          _
        // Predicated region
        $region29: #{tpu_custom_call.1} parent=23 // pred_check
          %p182 = pneg %p65
        $region30: #{tpu_custom_call.1} parent=23 // pred_check_branch
          %184 = sbr.rel (%p182) target = $region32
        $region31: #{tpu_custom_call.1} parent=23 // pred_region
          %s185 = sand.u32 %s55, 1
          %s186 = scalar_lea.sflag [#allocation6], %s185
          %s187 = sand.u32 %s55, 1
          %s188 = smul.addr %s187, 8
          %s189 = scalar_lea.vmem [#allocation5], %s188
          %s191 = ssub.s32 128, 128
          %192 = vsyncadd %s186, %s191
          %s193 = smul.addr %s19, 128
          %s194 = scalar_lea.hbm %s1, %s193
          %s196 = sshll.u32 %s189, 4
          %s197 = int_to_ptr.vmem [resolvable:$true] %s196
          %199 = dma.hbm_to_vmem [thread:$0]  %s194, 128, %s197, %s186
        $region32: #{tpu_custom_call.1} parent=23 // pred_fallthru
          _
      $region24: #{tpu_custom_call.1} parent=5 // pred_fallthru
        _
      %p200 = scmp.le.s32.totalorder 1, %s19
      %p201 = scmp.lt.s32.totalorder %s19, 3
      %p202 = pnand %p200, %p201
      %p203 = pneg %p202
      // Predicated region
      $region33: #{tpu_custom_call.1} parent=5 // pred_check
        _
      $region34: #{tpu_custom_call.1} parent=5 // pred_check_branch
        %205 = sbr.rel (%p202) target = $region36
      $region35: #{tpu_custom_call.1} parent=5 // pred_region
        %s206 = ssub.s32 %s19, 1
        %s207 = sand.u32 %s32, 1
        %s208 = scalar_lea.sflag [#allocation3], %s207
        %s209 = sand.u32 %s32, 1
        %s210 = smul.addr %s209, 8
        %s211 = scalar_lea.vmem [#allocation2], %s210
        // Predicated region
        $region37: #{tpu_custom_call.1} parent=35 // pred_check
          %p212 = pneg %p45
        $region38: #{tpu_custom_call.1} parent=35 // pred_check_branch
          %214 = sbr.rel (%p212) target = $region40
        $region39: #{tpu_custom_call.1} parent=35 // pred_region
          %215 = dma.done %s208, 128
        $region40: #{tpu_custom_call.1} parent=35 // pred_fallthru
          _
        %s216 = sand.u32 %s58, 1
        %s217 = scalar_lea.sflag [#allocation6], %s216
        %s218 = sand.u32 %s58, 1
        %s219 = smul.addr %s218, 8
        %s220 = scalar_lea.vmem [#allocation5], %s219
        // Predicated region
        $region41: #{tpu_custom_call.1} parent=35 // pred_check
          %p221 = pneg %p71
        $region42: #{tpu_custom_call.1} parent=35 // pred_check_branch
          %223 = sbr.rel (%p221) target = $region44
        $region43: #{tpu_custom_call.1} parent=35 // pred_region
          %224 = dma.done %s217, 128
        $region44: #{tpu_custom_call.1} parent=35 // pred_fallthru
          _
        %s225 = sand.u32 %s32, 1
        %s226 = scalar_lea.sflag [#allocation3], %s225
        %s227 = sand.u32 %s32, 1
        %s228 = smul.addr %s227, 8
        %s229 = scalar_lea.vmem [#allocation2], %s228
        %p230 = pneg %p45
        %p231 = pneg %p42
        %s232 = sand.u32 %s58, 1
        %s233 = scalar_lea.sflag [#allocation6], %s232
        %s234 = sand.u32 %s58, 1
        %s235 = smul.addr %s234, 8
        %s236 = scalar_lea.vmem [#allocation5], %s235
        %p237 = pneg %p71
        %p238 = pneg %p68
        %p239 = pneg %p92
        %p240 = pneg %p89
        %p241 = pneg %p113
        %p242 = pneg %p110
        %p243 = pneg %p139
        %p244 = pneg %p136
        %s245 = sand.u32 %s126, 1
        %s246 = scalar_lea.sflag [#allocation4], %s245
        %s247 = sand.u32 %s126, 1
        %s248 = smul.addr %s247, 8
        %s249 = scalar_lea.vmem [#allocation7], %s248
        %v250 = vld [vmem:[%s211] sm:$0xff]
        %v251 = vld [vmem:[%s220] sm:$0xff]
        %v252 = vadd.f32 %v250, %v251
        %vm253 = vcmask 261120
        %v254 = vsel %vm253, %v252, 0.0
        %255 = vadd.xlane.f32.xlu0 %v254
        %v256 = vpop.xlane.xlu0 %255
        %v257 = vmul.f32 %v256, 0.03125
        %v258 = vmul.f32 %v252, %v252
        %v259 = vsel %vm253, %v258, 0.0
        %260 = vadd.xlane.f32.xlu0 %v259
        %v261 = vpop.xlane.xlu0 %260
        %v262 = vmul.f32 %v261, 0.03125
        %v263 = vmul.f32 %v257, %v257
        %v264 = vsub.f32 %v262, %v263
        %v265 = vmax.f32 %v264, 0.0
        %v266 = vadd.f32 %v265, 1e-05
        %v267 = vrsqrt.pop %v266
        %v268 = vld [vmem:[%s2] sm:$0x1]
        %v269 = vld [vmem:[%s3] sm:$0x1]
        %v270 = vsub.f32 %v252, %v257
        %v271 = vmul.f32 %v270, %v267
        %v273 = vlaneseq
        %v274 = vshrl.u32 %v273, 7
        %v275 = vsub.s32 0, %v274
        %v276 = vrot.slane %v268, %v275
        %v278 = vmul.f32 %v271, %v276
        %v280 = vlaneseq
        %v281 = vshrl.u32 %v280, 7
        %v282 = vsub.s32 0, %v281
        %v283 = vrot.slane %v269, %v282
        %v285 = vadd.f32 %v278, %v283
        %286 = vst.msk [vmem:[%s249] sm:$0xff] %vm253, %v285
        %s287 = sand.u32 %s126, 1
        %s288 = scalar_lea.sflag [#allocation4], %s287
        %s289 = sand.u32 %s126, 1
        %s290 = smul.addr %s289, 8
        %s291 = scalar_lea.vmem [#allocation7], %s290
        // Predicated region
        $region45: #{tpu_custom_call.1} parent=35 // pred_check
          %p292 = pneg %p136
        $region46: #{tpu_custom_call.1} parent=35 // pred_check_branch
          %294 = sbr.rel (%p292) target = $region48
        $region47: #{tpu_custom_call.1} parent=35 // pred_region
          %s296 = ssub.s32 128, 128
          %297 = vsyncadd %s288, %s296
          %s298 = smul.addr %s24, 128
          %s299 = scalar_lea.hbm %s4, %s298
          %s301 = sshll.u32 %s291, 4
          %s302 = int_to_ptr.vmem [resolvable:$true] %s301
          %304 = dma.vmem_to_hbm [thread:$0]  %s302, 128, %s299, %s288
        $region48: #{tpu_custom_call.1} parent=35 // pred_fallthru
          _
      $region36: #{tpu_custom_call.1} parent=5 // pred_fallthru
        _
      %p305 = scmp.le.s32.totalorder 2, %s19
      // Predicated region
      $region49: #{tpu_custom_call.1} parent=5 // pred_check
        %p306 = pneg %p305
      $region50: #{tpu_custom_call.1} parent=5 // pred_check_branch
        %308 = sbr.rel (%p306) target = $region52
      $region51: #{tpu_custom_call.1} parent=5 // pred_region
        %s309 = ssub.s32 %s19, 2
        // Predicated region
        $region53: #{tpu_custom_call.1} parent=51 // pred_check
          %p310 = pneg %p142
        $region54: #{tpu_custom_call.1} parent=51 // pred_check_branch
          %312 = sbr.rel (%p310) target = $region56
        $region55: #{tpu_custom_call.1} parent=51 // pred_region
          %s313 = sand.u32 %s127, 1
          %s314 = scalar_lea.sflag [#allocation4], %s313
          %s315 = sand.u32 %s127, 1
          %s316 = smul.addr %s315, 8
          %s317 = scalar_lea.vmem [#allocation7], %s316
          %318 = dma.done %s314, 128
        $region56: #{tpu_custom_call.1} parent=51 // pred_fallthru
          _
      $region52: #{tpu_custom_call.1} parent=5 // pred_fallthru
        _
    $region6: #{tpu_custom_call.1} parent=1 // loop_footer
      %s23 = sadd.s32 1, %s19
    $region7: #{tpu_custom_call.1} parent=1 // loop_footer_branch
      %18 = sbr.rel target = $region3
    $region8: #{tpu_custom_call.1} parent=1 // loop_exit
      _
    %319 = vsyncpa [#allocation3], 1
    %s320 = scalar_lea.sflag [#allocation3], 1
    %321 = vsyncpa %s320, 1
    %322 = vsyncpa [#allocation6], 1
    %s323 = scalar_lea.sflag [#allocation6], 1
    %324 = vsyncpa %s323, 1
    %325 = vsyncpa [#allocation4], 1
    %s326 = scalar_lea.sflag [#allocation4], 1
    %327 = vsyncpa %s326, 1

</llo_original>
